<compile_context>
chip_gen: v6e
topology: v6e:2x2x1
jax: 0.10.0
libtpu: 0.0.40
codegen_flags: <defaults>
</compile_context>

<pallas_src>
import jax
import jax.numpy as jnp
from jax.experimental import pallas as pl
from jax.experimental.pallas import tpu as pltpu


def _round_up(x, m):
    return ((x + m - 1) // m) * m


def _dot_score_kernel(inp_ref, tgt_ref, out_ref):
    # inp_ref: (1, tn, D), tgt_ref: (1, tm, D), out_ref: (1, tm, tn)
    inp = inp_ref[0]          # (tn, D)
    tgt = tgt_ref[0]          # (tm, D)
    # score = targets @ inputs^T : contract over D directly on the MXU
    # (dimension_numbers avoids materializing inp.T via an XLU transpose).
    score = jax.lax.dot_general(
        tgt, inp,
        dimension_numbers=(((1,), (1,)), ((), ())),
        preferred_element_type=jnp.float32,
    )
    out_ref[0] = score.astype(out_ref.dtype)


def _tile_config():
    """Per-generation (tm_cap, tn_cap, vmem_limit_bytes)."""
    try:
        kind = jax.devices()[0].device_kind.lower()
    except Exception:
        kind = ""
    if "v6" in kind:
        # 128 MiB VMEM, 2x256^2 MXU: big tiles amortize per-step overhead.
        return 512, 512, 100 * 1024 * 1024
    if "v7" in kind:
        # 64 MiB physical VMEM per TC: stay well under it; 256 matches MXU.
        return 256, 256, 48 * 1024 * 1024
    # v5e (4x128^2 MXU, 16 MiB default scoped VMEM) and generic fallback.
    return 256, 256, 64 * 1024 * 1024


def dot_product_score(inputs, targets):
    """score = targets @ inputs.transpose(-2, -1), batched over leading dim."""
    B, S_in, D = inputs.shape
    Bt, S_tgt, Dt = targets.shape
    assert B == Bt and D == Dt, "batch / hidden dims must match"

    tm_cap, tn_cap, vmem_limit = _tile_config()
    # tm: rows of the output tile (sublane axis) -> multiple of 8.
    # tn: cols of the output tile (lane axis)    -> multiple of 128 (lane-dense).
    tm = min(tm_cap, _round_up(S_tgt, 8))
    tn = min(tn_cap, _round_up(S_in, 128))

    S_tgt_p = _round_up(S_tgt, tm)
    S_in_p = _round_up(S_in, tn)

    # Zero-pad sequences up to the tile grid; padded rows/cols are sliced off
    # afterwards so the result matches the reference exactly.
    if S_in_p != S_in:
        inputs = jnp.pad(inputs, ((0, 0), (0, S_in_p - S_in), (0, 0)))
    if S_tgt_p != S_tgt:
        targets = jnp.pad(targets, ((0, 0), (0, S_tgt_p - S_tgt), (0, 0)))

    n_in = S_in_p // tn
    n_tgt = S_tgt_p // tm

    itemsize = jnp.dtype(inputs.dtype).itemsize
    cost = pl.CostEstimate(
        flops=2 * B * S_tgt_p * S_in_p * D,
        transcendentals=0,
        bytes_accessed=(B * S_in_p * D + B * S_tgt_p * D
                        + B * S_tgt_p * S_in_p) * itemsize,
    )

    out = pl.pallas_call(
        _dot_score_kernel,
        out_shape=jax.ShapeDtypeStruct((B, S_tgt_p, S_in_p), inputs.dtype),
        # tgt-tile axis innermost: inputs block index is constant across it,
        # so Pallas skips re-DMA of the inputs tile between consecutive steps.
        grid=(B, n_in, n_tgt),
        in_specs=[
            pl.BlockSpec((1, tn, D), lambda b, j, i: (b, j, 0)),   # inputs tile
            pl.BlockSpec((1, tm, D), lambda b, j, i: (b, i, 0)),   # targets tile
        ],
        out_specs=pl.BlockSpec((1, tm, tn), lambda b, j, i: (b, i, j)),
        compiler_params=pltpu.CompilerParams(
            dimension_semantics=("parallel", "parallel", "parallel"),
            vmem_limit_bytes=vmem_limit,
        ),
        cost_estimate=cost,
    )(inputs, targets)

    if S_tgt_p != S_tgt or S_in_p != S_in:
        out = out[:, :S_tgt, :S_in]
    return out


if __name__ == "__main__":
    key = jax.random.PRNGKey(0)
    k_in, k_tgt = jax.random.split(key)

    B, S_in, S_tgt, D = 2, 16, 8, 32
    inputs = jax.random.normal(k_in, (B, S_in, D), dtype=jnp.float32)
    targets = jax.random.normal(k_tgt, (B, S_tgt, D), dtype=jnp.float32)

    score = dot_product_score(inputs, targets)
    jax.block_until_ready(score)

    # Reference check against plain JAX (same math as the torch forward).
    ref = jnp.einsum("btd,bsd->bts", targets, inputs)
    assert score.shape == (B, S_tgt, S_in)
    assert jnp.allclose(score, ref, atol=1e-5, rtol=1e-5)

    print("KERNEL_OK")
</pallas_src>

<mosaic_0001>
module attributes {stable_mosaic.version = 11 : i64} {
  func.func @_dot_score_kernel(%arg0: i32, %arg1: i32, %arg2: i32, %arg3: memref<1x128x32xf32, #tpu.memory_space<vmem>>, %arg4: memref<1x8x32xf32, #tpu.memory_space<vmem>>, %arg5: memref<1x8x128xf32, #tpu.memory_space<vmem>>) attributes {dimension_semantics = [#tpu.dimension_semantics<parallel>, #tpu.dimension_semantics<parallel>, #tpu.dimension_semantics<parallel>], iteration_bounds = array<i64: 2, 1, 1>, scalar_prefetch = 0 : i64, scratch_operands = 0 : i64, tpu.core_type = #tpu.core_type<tc>, window_params = [{transform_indices = @transform_0, window_bounds = array<i64: 1, 128, 32>}, {transform_indices = @transform_1, window_bounds = array<i64: 1, 8, 32>}, {transform_indices = @transform_2, window_bounds = array<i64: 1, 8, 128>}]} {
    %c0 = arith.constant 0 : index
    %c0_0 = arith.constant 0 : index
    %c0_1 = arith.constant 0 : index
    %0 = vector.load %arg3[%c0, %c0_0, %c0_1] : memref<1x128x32xf32, #tpu.memory_space<vmem>>, vector<1x128x32xf32>
    %1 = vector.shape_cast %0 : vector<1x128x32xf32> to vector<128x32xf32>
    %c0_2 = arith.constant 0 : index
    %c0_3 = arith.constant 0 : index
    %c0_4 = arith.constant 0 : index
    %2 = vector.load %arg4[%c0_2, %c0_3, %c0_4] : memref<1x8x32xf32, #tpu.memory_space<vmem>>, vector<1x8x32xf32>
    %3 = vector.shape_cast %2 : vector<1x8x32xf32> to vector<8x32xf32>
    %cst = arith.constant dense<0.000000e+00> : vector<8x128xf32>
    %4 = tpu.matmul %3, %1, %cst {dimension_numbers = #tpu.dot_dimension_numbers<[1], [1], [0], [0], [0, 0, 1, 0], [], []>} : vector<8x32xf32>, vector<128x32xf32>, vector<8x128xf32> -> vector<8x128xf32>
    %c0_5 = arith.constant 0 : index
    %c0_6 = arith.constant 0 : index
    %c0_7 = arith.constant 0 : index
    %5 = vector.load %arg5[%c0_5, %c0_6, %c0_7] : memref<1x8x128xf32, #tpu.memory_space<vmem>>, vector<1x8x128xf32>
    %6 = vector.shape_cast %5 : vector<1x8x128xf32> to vector<8x128xf32>
    %7 = vector.shape_cast %4 : vector<8x128xf32> to vector<1x8x128xf32>
    tpu.vector_store %arg5[%c0_5, %c0_6, %c0_7], %7 {strides = array<i32>} : memref<1x8x128xf32, #tpu.memory_space<vmem>>, vector<1x8x128xf32>,
    return
  }
  func.func @transform_0(%arg0: i32, %arg1: i32, %arg2: i32) -> (i32, i32, i32) {
    %c0_i32 = arith.constant 0 : i32
    %c0_i32_0 = arith.constant 0 : i32
    return %arg0, %arg1, %c0_i32 : i32, i32, i32
  }
  func.func @transform_1(%arg0: i32, %arg1: i32, %arg2: i32) -> (i32, i32, i32) {
    %c0_i32 = arith.constant 0 : i32
    %c0_i32_0 = arith.constant 0 : i32
    return %arg0, %arg2, %c0_i32 : i32, i32, i32
  }
  func.func @transform_2(%arg0: i32, %arg1: i32, %arg2: i32) -> (i32, i32, i32) {
    %c0_i32 = arith.constant 0 : i32
    return %arg0, %arg2, %arg1 : i32, i32, i32
  }
}

</mosaic_0001>

<llo_original>
// kernel: tpu_custom_call.1
$region0: #{tpu_custom_call.1}
  #allocation0 [shape = 'u32[]', space=smem, size = 0x4, offset = 0x4, fixed_abs, tag = 'smem constant byte address 0x4 - core index']
  #allocation1 [shape = 'u32[144,128]{1,0:T(1,128)}', space=vmem, size = 0x12000, scoped, tag = 'internal scratch']
  %s0 = inlined_call_operand.vmem [shape: f32[2,128,32], index: 0, kind: input, shape index: {}]
  %s1 = inlined_call_operand.vmem [shape: f32[2,8,32], index: 1, kind: input, shape index: {}]
  %s2 = inlined_call_operand.hbm [shape: f32[2,8,128], index: 2, kind: output, shape index: {}]
  %s3 = sld [smem:[#allocation0]]
  $region41: #{tpu_custom_call.1} parent=0
    _
  %s5 = ssub.s32 1, %s3
  %s6 = scalar_select 0, %s5, %s3
  $region1: #{tpu_custom_call.1} parent=0
    #allocation2 [shape = 'u8[8192]{0}', space=vmem, size = 0x2000, scoped, tag = 'output window, operand 0']
    #allocation3 [shape = 's32[2]{0}', space=sflag, size = 0x8, scoped, tag = 'scoped memory for tpu_custom_call.1']
    %7 = vsyncpa [#allocation3], 0
    %s8 = scalar_lea.sflag [#allocation3], 1
    %9 = vsyncpa %s8, 0
    loop: start=0, step=1, limit=4
    $region2: #{tpu_custom_call.1} parent=1 // loop_pre_header
      _
    $region3: #{tpu_custom_call.1} parent=1 // loop_header
      %s11 = sphi 0, %s15
      %p12 = scmp.ge.s32.totalorder %s11, 4
      %s18 = sphi 0, %s37
      %s19 = sphi 0, %s33
      %s20 = sphi 0, %s29
      %s21 = sphi 0, %s18
      %s22 = sphi 0, %s19
      %s23 = sphi 0, %s20
      %s24 = sphi 0, %s21
      %s25 = sphi 0, %s22
      %s26 = sphi 0, %s23
      %s42 = sphi 0, %s44
      %s45 = sphi 0, %s42
      %s46 = sphi 0, %s45
      %s62 = sphi 0, %s46
      %s70 = sphi 0, %s72
      %s73 = sphi 0, %s70
      %s74 = sphi 0, %s73
      %s90 = sphi 0, %s74
      %s100 = sphi 0, %s102
      %s103 = sphi 0, %s100
      %s104 = sphi 0, %s103
      %s120 = sphi 0, %s104
    $region4: #{tpu_custom_call.1} parent=1 // loop_header_branch
      %14 = sbr.rel (%p12) target = $region8
    $region5: #{tpu_custom_call.1} parent=1 // loop_body
      %s16 = ssub.s32 %s11, 1
      %s17 = ssub.s32 %s11, 2
      %s27 = sadd.s32 1, %s20
      %p28 = scmp.ge.s32.totalorder %s27, 1
      %s29 = scalar_select %p28, 0, %s27
      %s30 = sadd.s32 1, %s19
      %s31 = scalar_select %p28, %s30, %s19
      %p32 = scmp.ge.s32.totalorder %s31, 1
      %s33 = scalar_select %p32, 0, %s31
      %s34 = sadd.s32 1, %s18
      %s35 = scalar_select %p32, %s34, %s18
      %p36 = scmp.ge.s32.totalorder %s35, 2
      %s37 = scalar_select %p36, 0, %s35
      %s38 = ssub.s32 %s18, %s37
      %s39 = ssub.s32 %s19, %s33
      %s40 = sor.u32 %s38, %s39
      %p41 = scmp.eq.s32.totalorder %s40, 0
      %s43 = sadd.s32 %s42, 1
      %s44 = scalar_select %p41, %s42, %s43
      %p47 = pneg %p41
      %p48 = scmp.eq.s32.totalorder %s11, 1
      %p49 = por %p47, %p48
      %p50 = scmp.ne.s32.totalorder %s42, %s45
      %p51 = scmp.eq.s32.totalorder %s11, 0
      %p52 = por %p50, %p51
      %p53 = scmp.ne.s32.totalorder %s42, %s45
      %p54 = scmp.eq.s32.totalorder %s16, 1
      %p55 = por %p53, %p54
      %p56 = scmp.ne.s32.totalorder %s45, %s46
      %p57 = scmp.eq.s32.totalorder %s16, 0
      %p58 = por %p56, %p57
      %p59 = scmp.ne.s32.totalorder %s45, %s46
      %p60 = scmp.eq.s32.totalorder %s17, 1
      %p61 = por %p59, %p60
      %p63 = scmp.ne.s32.totalorder %s46, %s62
      %p64 = scmp.eq.s32.totalorder %s17, 0
      %p65 = por %p63, %p64
      %s66 = ssub.s32 %s18, %s37
      %s67 = ssub.s32 %s20, %s29
      %s68 = sor.u32 %s66, %s67
      %p69 = scmp.eq.s32.totalorder %s68, 0
      %s71 = sadd.s32 %s70, 1
      %s72 = scalar_select %p69, %s70, %s71
      %p75 = pneg %p69
      %p76 = scmp.eq.s32.totalorder %s11, 1
      %p77 = por %p75, %p76
      %p78 = scmp.ne.s32.totalorder %s70, %s73
      %p79 = scmp.eq.s32.totalorder %s11, 0
      %p80 = por %p78, %p79
      %p81 = scmp.ne.s32.totalorder %s70, %s73
      %p82 = scmp.eq.s32.totalorder %s16, 1
      %p83 = por %p81, %p82
      %p84 = scmp.ne.s32.totalorder %s73, %s74
      %p85 = scmp.eq.s32.totalorder %s16, 0
      %p86 = por %p84, %p85
      %p87 = scmp.ne.s32.totalorder %s73, %s74
      %p88 = scmp.eq.s32.totalorder %s17, 1
      %p89 = por %p87, %p88
      %p91 = scmp.ne.s32.totalorder %s74, %s90
      %p92 = scmp.eq.s32.totalorder %s17, 0
      %p93 = por %p91, %p92
      %s94 = ssub.s32 %s18, %s37
      %s95 = ssub.s32 %s20, %s29
      %s96 = sor.u32 %s94, %s95
      %s97 = ssub.s32 %s19, %s33
      %s98 = sor.u32 %s96, %s97
      %p99 = scmp.eq.s32.totalorder %s98, 0
      %s101 = sadd.s32 %s100, 1
      %s102 = scalar_select %p99, %s100, %s101
      %p105 = pneg %p99
      %p106 = scmp.eq.s32.totalorder %s11, 1
      %p107 = por %p105, %p106
      %p108 = scmp.ne.s32.totalorder %s100, %s103
      %p109 = scmp.eq.s32.totalorder %s11, 0
      %p110 = por %p108, %p109
      %p111 = scmp.ne.s32.totalorder %s100, %s103
      %p112 = scmp.eq.s32.totalorder %s16, 1
      %p113 = por %p111, %p112
      %p114 = scmp.ne.s32.totalorder %s103, %s104
      %p115 = scmp.eq.s32.totalorder %s16, 0
      %p116 = por %p114, %p115
      %p117 = scmp.ne.s32.totalorder %s103, %s104
      %p118 = scmp.eq.s32.totalorder %s17, 1
      %p119 = por %p117, %p118
      %p121 = scmp.ne.s32.totalorder %s104, %s120
      %p122 = scmp.eq.s32.totalorder %s17, 0
      %p123 = por %p121, %p122
      %p124 = scmp.le.s32.totalorder 1, %s11
      %p125 = scmp.lt.s32.totalorder %s11, 3
      %p126 = pnand %p124, %p125
      %p127 = pneg %p126
      // Predicated region
      $region9: #{tpu_custom_call.1} parent=5 // pred_check
        _
      $region10: #{tpu_custom_call.1} parent=5 // pred_check_branch
        %129 = sbr.rel (%p126) target = $region12
      $region11: #{tpu_custom_call.1} parent=5 // pred_region
        %s130 = ssub.s32 %s11, 1
      $region12: #{tpu_custom_call.1} parent=5 // pred_fallthru
        _
      %p131 = scmp.lt.s32.totalorder %s11, 2
      // Predicated region
      $region13: #{tpu_custom_call.1} parent=5 // pred_check
        %p132 = pneg %p131
      $region14: #{tpu_custom_call.1} parent=5 // pred_check_branch
        %134 = sbr.rel (%p132) target = $region16
      $region15: #{tpu_custom_call.1} parent=5 // pred_region
        // Predicated region
        $region17: #{tpu_custom_call.1} parent=15 // pred_check
          %p135 = pneg %p52
        $region18: #{tpu_custom_call.1} parent=15 // pred_check_branch
          %137 = sbr.rel (%p135) target = $region20
        $region19: #{tpu_custom_call.1} parent=15 // pred_region
          %s138 = smul.u32 16, %s19
          %p139 = scmp.lt.s32.totalorder %s18, 1
          %s140 = scalar_select %p139, %s18, 1
          %p141 = scmp.lt.s32.totalorder %s138, 15
          %s142 = scalar_select %p141, %s138, 15
          %s143 = smul.addr %s140, 16
          %s144 = sadd.s32 %s142, %s143
          %s145 = smul.addr %s144, 8
          %s146 = scalar_lea.vmem %s0, %s145
          %s147 = smul.u32 16, %s19
        $region20: #{tpu_custom_call.1} parent=15 // pred_fallthru
          _
        // Predicated region
        $region21: #{tpu_custom_call.1} parent=15 // pred_check
          %p148 = pneg %p80
        $region22: #{tpu_custom_call.1} parent=15 // pred_check_branch
          %150 = sbr.rel (%p148) target = $region24
        $region23: #{tpu_custom_call.1} parent=15 // pred_region
          %p151 = scmp.lt.s32.totalorder %s18, 1
          %s152 = scalar_select %p151, %s18, 1
          %p153 = scmp.lt.s32.totalorder %s20, 0
          %s154 = scalar_select %p153, %s20, 0
          %s155 = sadd.s32 %s154, %s152
          %s156 = smul.addr %s155, 8
          %s157 = scalar_lea.vmem %s1, %s156
        $region24: #{tpu_custom_call.1} parent=15 // pred_fallthru
          _
      $region16: #{tpu_custom_call.1} parent=5 // pred_fallthru
        _
      %p158 = scmp.le.s32.totalorder 1, %s11
      %p159 = scmp.lt.s32.totalorder %s11, 3
      %p160 = pnand %p158, %p159
      %p161 = pneg %p160
      // Predicated region
      $region25: #{tpu_custom_call.1} parent=5 // pred_check
        _
      $region26: #{tpu_custom_call.1} parent=5 // pred_check_branch
        %163 = sbr.rel (%p160) target = $region28
      $region27: #{tpu_custom_call.1} parent=5 // pred_region
        %s164 = ssub.s32 %s11, 1
        %s165 = smul.u32 16, %s22
        %p166 = scmp.lt.s32.totalorder %s21, 1
        %s167 = scalar_select %p166, %s21, 1
        %p168 = scmp.lt.s32.totalorder %s165, 15
        %s169 = scalar_select %p168, %s165, 15
        %s170 = smul.addr %s167, 16
        %s171 = sadd.s32 %s169, %s170
        %s172 = smul.addr %s171, 8
        %s173 = scalar_lea.vmem %s0, %s172
        %p174 = pneg %p58
        %p175 = pneg %p55
        %p176 = scmp.lt.s32.totalorder %s21, 1
        %s177 = scalar_select %p176, %s21, 1
        %p178 = scmp.lt.s32.totalorder %s23, 0
        %s179 = scalar_select %p178, %s23, 0
        %s180 = sadd.s32 %s179, %s177
        %s181 = smul.addr %s180, 8
        %s182 = scalar_lea.vmem %s1, %s181
        %p183 = pneg %p86
        %p184 = pneg %p83
        %p185 = pneg %p116
        %p186 = pneg %p113
        %s187 = sand.u32 %s103, 1
        %s188 = scalar_lea.sflag [#allocation3], %s187
        %s189 = sand.u32 %s103, 1
        %s190 = smul.addr %s189, 8
        %s191 = scalar_lea.vmem [#allocation2], %s190
        %s192 = smul.u32 16, %s22
        %p193 = scmp.lt.s32.totalorder %s21, 1
        %s194 = scalar_select %p193, %s21, 1
        %p195 = scmp.lt.s32.totalorder %s192, 15
        %s196 = scalar_select %p195, %s192, 15
        %s197 = smul.addr %s194, 16
        %s198 = sadd.s32 %s196, %s197
        %s199 = smul.addr %s198, 8
        %s200 = scalar_lea.vmem %s0, %s199
        %s201 = smul.u32 16, %s22
        %p202 = scmp.lt.s32.totalorder %s21, 1
        %s203 = scalar_select %p202, %s21, 1
        %p204 = scmp.lt.s32.totalorder %s23, 0
        %s205 = scalar_select %p204, %s23, 0
        %s206 = sadd.s32 %s205, %s203
        %s207 = smul.addr %s206, 8
        %s208 = scalar_lea.vmem %s1, %s207
        %v209 = vld [vmem:[%s200] sm:$0xff]
        %v210 = vld [vmem:[%s200 + $0x8] sm:$0xff]
        %v211 = vld [vmem:[%s200 + $0x10] sm:$0xff]
        %v212 = vld [vmem:[%s200 + $0x18] sm:$0xff]
        %v213 = vld [vmem:[%s200 + $0x20] sm:$0xff]
        %v214 = vld [vmem:[%s200 + $0x28] sm:$0xff]
        %v215 = vld [vmem:[%s200 + $0x30] sm:$0xff]
        %v216 = vld [vmem:[%s200 + $0x38] sm:$0xff]
        %v217 = vld [vmem:[%s200 + $0x40] sm:$0xff]
        %v218 = vld [vmem:[%s200 + $0x48] sm:$0xff]
        %v219 = vld [vmem:[%s200 + $0x50] sm:$0xff]
        %v220 = vld [vmem:[%s200 + $0x58] sm:$0xff]
        %v221 = vld [vmem:[%s200 + $0x60] sm:$0xff]
        %v222 = vld [vmem:[%s200 + $0x68] sm:$0xff]
        %v223 = vld [vmem:[%s200 + $0x70] sm:$0xff]
        %v224 = vld [vmem:[%s200 + $0x78] sm:$0xff]
        %v225 = vld [vmem:[%s208] sm:$0xff]
        %vm226 = vcmask 261120
        %v228 = vsel %vm226, %v225, 0
        %v231 = vsel %vm226, %v209, 0
        %v234 = vsel %vm226, %v210, 0
        %v237 = vsel %vm226, %v211, 0
        %v240 = vsel %vm226, %v212, 0
        %v243 = vsel %vm226, %v213, 0
        %v246 = vsel %vm226, %v214, 0
        %v249 = vsel %vm226, %v215, 0
        %v252 = vsel %vm226, %v216, 0
        %v255 = vsel %vm226, %v217, 0
        %v258 = vsel %vm226, %v218, 0
        %v261 = vsel %vm226, %v219, 0
        %v264 = vsel %vm226, %v220, 0
        %v267 = vsel %vm226, %v221, 0
        %v270 = vsel %vm226, %v222, 0
        %v273 = vsel %vm226, %v223, 0
        %v276 = vsel %vm226, %v224, 0
        %278 = vmatprep.subr.mxu0 0.0
        %279 = vmatpush1.xpose.msra.mxu0 %v276
        %280 = vmatprep.subr.mxu0 0.0
        %281 = vmatpush1.xpose.msra.mxu0 %v273
        %282 = vmatprep.subr.mxu0 0.0
        %283 = vmatpush1.xpose.msra.mxu0 %v270
        %284 = vmatprep.subr.mxu0 0.0
        %285 = vmatpush1.xpose.msra.mxu0 %v267
        %286 = vmatprep.subr.mxu0 0.0
        %287 = vmatpush1.xpose.msra.mxu0 %v264
        %288 = vmatprep.subr.mxu0 0.0
        %289 = vmatpush1.xpose.msra.mxu0 %v261
        %290 = vmatprep.subr.mxu0 0.0
        %291 = vmatpush1.xpose.msra.mxu0 %v258
        %292 = vmatprep.subr.mxu0 0.0
        %293 = vmatpush1.xpose.msra.mxu0 %v255
        %294 = vmatprep.subr.mxu0 0.0
        %295 = vmatpush1.xpose.msra.mxu0 %v252
        %296 = vmatprep.subr.mxu0 0.0
        %297 = vmatpush1.xpose.msra.mxu0 %v249
        %298 = vmatprep.subr.mxu0 0.0
        %299 = vmatpush1.xpose.msra.mxu0 %v246
        %300 = vmatprep.subr.mxu0 0.0
        %301 = vmatpush1.xpose.msra.mxu0 %v243
        %302 = vmatprep.subr.mxu0 0.0
        %303 = vmatpush1.xpose.msra.mxu0 %v240
        %304 = vmatprep.subr.mxu0 0.0
        %305 = vmatpush1.xpose.msra.mxu0 %v237
        %306 = vmatprep.subr.mxu0 0.0
        %307 = vmatpush1.xpose.msra.mxu0 %v234
        %308 = vmatprep.subr.mxu0 0.0
        %309 = vmatpush1.xpose.msra.mxu0 %v231
        %310 = vmatprep.subr.mxu0 0.0
        %311 = vmatpush2.xpose.msra.mxu0 0.0
        %312 = vmatprep.subr.mxu0 0.0
        %313 = vmatpush2.xpose.msra.mxu0 0.0
        %314 = vmatprep.subr.mxu0 0.0
        %315 = vmatpush2.xpose.msra.mxu0 0.0
        %316 = vmatprep.subr.mxu0 0.0
        %317 = vmatpush2.xpose.msra.mxu0 0.0
        %318 = vmatprep.subr.mxu0 0.0
        %319 = vmatpush2.xpose.msra.mxu0 0.0
        %320 = vmatprep.subr.mxu0 0.0
        %321 = vmatpush2.xpose.msra.mxu0 0.0
        %322 = vmatprep.subr.mxu0 0.0
        %323 = vmatpush2.xpose.msra.mxu0 0.0
        %324 = vmatprep.subr.mxu0 0.0
        %325 = vmatpush2.xpose.msra.mxu0 0.0
        %326 = vmatprep.subr.mxu0 0.0
        %327 = vmatpush2.xpose.msra.mxu0 0.0
        %328 = vmatprep.subr.mxu0 0.0
        %329 = vmatpush2.xpose.msra.mxu0 0.0
        %330 = vmatprep.subr.mxu0 0.0
        %331 = vmatpush2.xpose.msra.mxu0 0.0
        %332 = vmatprep.subr.mxu0 0.0
        %333 = vmatpush2.xpose.msra.mxu0 0.0
        %334 = vmatprep.subr.mxu0 0.0
        %335 = vmatpush2.xpose.msra.mxu0 0.0
        %336 = vmatprep.subr.mxu0 0.0
        %337 = vmatpush2.xpose.msra.mxu0 0.0
        %338 = vmatprep.subr.mxu0 0.0
        %339 = vmatpush2.xpose.msra.mxu0 0.0
        %340 = vmatprep.subr.mxu0 0.0
        %341 = vmatpush2.xpose.msra.mxu0 0.0
        %342 = vmatprep.mubr.f32.mxu0 0.0
        %343 = vmatmul.mubr.f32.gmra.mxu0 %v228
        %v344 = vpop.f32.mrf.mxu0
        %v345 = vadd.f32 0.0, %v344
        %v346 = vpop.f32.mrf.mxu0
        %347 = vdwg.mxu0
        %348 = vst [vmem:[%s191] sm:$0xff] %v345
        %s349 = sand.u32 %s103, 1
        %s350 = scalar_lea.sflag [#allocation3], %s349
        %s351 = sand.u32 %s103, 1
        %s352 = smul.addr %s351, 8
        %s353 = scalar_lea.vmem [#allocation2], %s352
        // Predicated region
        $region29: #{tpu_custom_call.1} parent=27 // pred_check
          %p354 = pneg %p113
        $region30: #{tpu_custom_call.1} parent=27 // pred_check_branch
          %356 = sbr.rel (%p354) target = $region32
        $region31: #{tpu_custom_call.1} parent=27 // pred_region
          %s358 = ssub.s32 128, 128
          %359 = vsyncadd %s350, %s358
          %s360 = sadd.s32 %s22, %s23
          %s361 = sadd.s32 %s360, %s21
          %s362 = smul.addr %s361, 128
          %s363 = scalar_lea.hbm %s2, %s362
          %s365 = sshll.u32 %s353, 4
          %s366 = int_to_ptr.vmem [resolvable:$true] %s365
          %368 = dma.vmem_to_hbm [thread:$0]  %s366, 128, %s363, %s350
        $region32: #{tpu_custom_call.1} parent=27 // pred_fallthru
          _
      $region28: #{tpu_custom_call.1} parent=5 // pred_fallthru
        _
      %p369 = scmp.le.s32.totalorder 2, %s11
      // Predicated region
      $region33: #{tpu_custom_call.1} parent=5 // pred_check
        %p370 = pneg %p369
      $region34: #{tpu_custom_call.1} parent=5 // pred_check_branch
        %372 = sbr.rel (%p370) target = $region36
      $region35: #{tpu_custom_call.1} parent=5 // pred_region
        %s373 = ssub.s32 %s11, 2
        // Predicated region
        $region37: #{tpu_custom_call.1} parent=35 // pred_check
          %p374 = pneg %p119
        $region38: #{tpu_custom_call.1} parent=35 // pred_check_branch
          %376 = sbr.rel (%p374) target = $region40
        $region39: #{tpu_custom_call.1} parent=35 // pred_region
          %s377 = sand.u32 %s104, 1
          %s378 = scalar_lea.sflag [#allocation3], %s377
          %s379 = sand.u32 %s104, 1
          %s380 = smul.addr %s379, 8
          %s381 = scalar_lea.vmem [#allocation2], %s380
          %382 = dma.done %s378, 128
        $region40: #{tpu_custom_call.1} parent=35 // pred_fallthru
          _
      $region36: #{tpu_custom_call.1} parent=5 // pred_fallthru
        _
    $region6: #{tpu_custom_call.1} parent=1 // loop_footer
      %s15 = sadd.s32 1, %s11
    $region7: #{tpu_custom_call.1} parent=1 // loop_footer_branch
      %10 = sbr.rel target = $region3
    $region8: #{tpu_custom_call.1} parent=1 // loop_exit
      _
    %383 = vsyncpa [#allocation3], 1
    %s384 = scalar_lea.sflag [#allocation3], 1
    %385 = vsyncpa %s384, 1

</llo_original>
